<compile_context>
chip_gen: v7x
topology: tpu7x:2x2x1
jax: 0.10.0
libtpu: 0.0.40
codegen_flags: <defaults>
</compile_context>

<pallas_src>
import numpy as np
import jax
import jax.numpy as jnp
from jax.experimental import pallas as pl
from jax.experimental.pallas import tpu as pltpu


def _round_up(a, b):
    return ((a + b - 1) // b) * b


# ---------------------------------------------------------------------------
# Kernel factory: wavelet taps, nt and the halo-buffer height are baked in.
# ---------------------------------------------------------------------------
def _make_convmod_kernel(wav_taps, nt, nth):
    K = len(wav_taps)
    P = (K - 1) // 2  # torch 'same' padding for odd kernels

    def kernel(x_ref, o_ref, refl_ref):
        # x_ref: (nt, TN) tile of log-impedance; time on sublanes, traces on lanes.
        x = x_ref[...]                                     # (nt, TN) f32
        tn = x.shape[1]

        # refl[t] = (e^{x[t+1]} - e^{x[t]}) / (e^{x[t+1]} + e^{x[t]})
        #         = tanh((x[t+1] - x[t]) / 2)
        # Computed on all nt rows via one XLU roll (row nt-1 is garbage and is
        # overwritten by the zero halo below).
        x_next = pltpu.roll(x, shift=nt - 1, axis=0)       # x_next[t] = x[(t+1) % nt]
        refl = jnp.tanh(0.5 * (x_next - x))                # (nt, TN)

        # Zero-halo reflectivity buffer (8-row aligned): rows [0, nt-2] hold
        # refl, rows [nt-1, NTH) are zero.  NTH >= nt + P, so every wrapped
        # roll index below lands on a zero row.
        refl_ref[pl.ds(0, nt), :] = refl
        refl_ref[pl.ds(nt - 1, nth - nt + 1), :] = jnp.zeros(
            (nth - nt + 1, tn), jnp.float32)
        rp = refl_ref[...]                                 # (NTH, TN)

        # 'same' cross-correlation: seis[t] = sum_k wav[k] * rp[t + k - P]
        # -> K XLU rolls (free slot) + K VPU mul-adds.
        s0 = P % nth
        acc = wav_taps[0] * (pltpu.roll(rp, shift=s0, axis=0) if s0 else rp)
        for k in range(1, K):
            s = (P - k) % nth
            rolled = pltpu.roll(rp, shift=s, axis=0) if s else rp
            acc = acc + wav_taps[k] * rolled

        o_ref[...] = acc[:nt, :].astype(o_ref.dtype)
        # Trailing zero row (the F.pad(..., (0, 1)) in the torch code):
        # a single masked 1-row store instead of an iota + where mask.
        o_ref[pl.ds(nt - 1, 1), :] = jnp.zeros((1, tn), o_ref.dtype)

    return kernel


# ---------------------------------------------------------------------------
# Wrapper: Pallas equivalent of ConvMod(wav, nt).forward
# ---------------------------------------------------------------------------
class ConvModPallas:
    def __init__(self, wav, nt, trace_tile=256, out_dtype=jnp.float32):
        wav = np.asarray(wav, np.float32)
        assert wav.ndim == 1 and wav.shape[0] % 2 == 1, \
            "zero-phase (odd-length) wavelet assumed (wavcenter = K//2)"
        assert trace_tile % 128 == 0, "trace tile must be lane-dense"
        self.nt = int(nt)
        self.K = int(wav.shape[0])
        self.P = (self.K - 1) // 2
        self.trace_tile = int(trace_tile)
        self.out_dtype = out_dtype        # bf16 halves store bytes on v5e/v6e
        self.wav_taps = tuple(float(w) for w in wav)
        self._calls = {}                  # pallas_call cache, keyed by ntraces

    def _build(self, ntr):
        nt, P = self.nt, self.P
        nth = _round_up(nt + P, 8)        # 8-row-aligned zero-halo buffer height

        # Lane tile: full-dim block for small trace counts (exactly in-bounds,
        # no pad/crop); otherwise a lane-dense multiple of 128, capped so that
        # ~10 live copies of an (nt, TN) f32 block stay under ~48 MiB (v7x).
        if ntr <= 128:
            tn = ntr
        else:
            tn = min(self.trace_tile, _round_up(ntr, 128))
            max_tn = max(128, (((48 << 20) // (10 * nt * 4)) // 128) * 128)
            tn = min(tn, max_tn)
        grid_n = pl.cdiv(ntr, tn)

        blk_bytes = nt * tn * 4
        scratch_bytes = nth * tn * 4
        # double-buffered input + output, scratch, and ~4 live full-tile temps
        vmem_est = 4 * blk_bytes + 5 * scratch_bytes
        vmem_limit = int(min(60 * 2**20, max(32 * 2**20, vmem_est + (16 << 20))))

        out_itemsize = jnp.dtype(self.out_dtype).itemsize
        cost = pl.CostEstimate(
            flops=2 * self.K * nt * ntr,
            transcendentals=nt * ntr,
            bytes_accessed=nt * ntr * 4 + nt * ntr * out_itemsize,
        )

        kernel = _make_convmod_kernel(self.wav_taps, nt, nth)
        return pl.pallas_call(
            kernel,
            out_shape=jax.ShapeDtypeStruct((nt, ntr), self.out_dtype),
            grid=(grid_n,),
            in_specs=[pl.BlockSpec((nt, tn), lambda j: (0, j))],
            out_specs=pl.BlockSpec((nt, tn), lambda j: (0, j)),
            scratch_shapes=[pltpu.VMEM((nth, tn), jnp.float32)],
            compiler_params=pltpu.CompilerParams(
                dimension_semantics=("parallel",),
                vmem_limit_bytes=vmem_limit),
            cost_estimate=cost,
        )

    def __call__(self, x):
        nt = self.nt
        x2d = jnp.asarray(x, jnp.float32).reshape(nt, -1)   # (nt, ntraces)
        ntr = x2d.shape[1]

        call = self._calls.get(ntr)
        if call is None:
            call = self._build(ntr)
            self._calls[ntr] = call

        out = call(x2d)                   # (nt, ntraces) — no pad, no crop
        if ntr == 1:                      # mimic torch .squeeze() for one trace
            out = out.reshape(nt)
        return out


# ---------------------------------------------------------------------------
# Pure-JAX reference (mirrors the torch code path) for a correctness check.
# ---------------------------------------------------------------------------
def ref_forward(x, wav, nt):
    x2d = jnp.asarray(x, jnp.float32).reshape(nt, -1)
    ai = jnp.exp(x2d)
    refl = (ai[1:] - ai[:-1]) / (ai[1:] + ai[:-1])           # (nt-1, T)
    K = wav.shape[0]
    P = (K - 1) // 2
    refl_pad = jnp.pad(refl, ((P, K - 1 - P), (0, 0)))
    rows = [jnp.sum(refl_pad[t:t + K] * wav[:, None], axis=0) for t in range(nt - 1)]
    seis = jnp.stack(rows, axis=0)
    seis = jnp.concatenate([seis, jnp.zeros((1, refl.shape[1]), seis.dtype)], axis=0)
    if seis.shape[1] == 1:
        seis = seis.reshape(nt)
    return seis


if __name__ == "__main__":
    K = 7  # odd, zero-phase wavelet
    tt = jnp.arange(K, dtype=jnp.float32) - (K // 2)
    wav = (1.0 - 2.0 * (0.5 * tt) ** 2) * jnp.exp(-((0.5 * tt) ** 2))

    key = jax.random.PRNGKey(0)
    k1, k2 = jax.random.split(key)

    # --- small multi-trace case (full-dim lane block, single grid step) ----
    nt, ntraces = 16, 8
    x = 8.0 + 0.1 * jax.random.normal(k1, (nt, ntraces), dtype=jnp.float32)
    mod = ConvModPallas(wav, nt)

    out = jax.block_until_ready(mod(x))
    ref = ref_forward(x, wav, nt)
    assert out.shape == (nt, ntraces)
    assert jnp.allclose(out, ref, atol=1e-5, rtol=1e-4), "multi-trace mismatch"

    # --- single-trace case (exercises the .squeeze() contract) ------------
    x1 = x[:, :1]
    out1 = jax.block_until_ready(mod(x1))
    ref1 = ref_forward(x1, wav, nt)
    assert out1.shape == (nt,)
    assert jnp.allclose(out1, ref1, atol=1e-5, rtol=1e-4), "single-trace mismatch"

    # --- ragged multi-tile case (grid=2, edge block, no wrapper pad/crop) --
    nt2, ntraces2 = 24, 200
    x2 = 8.0 + 0.1 * jax.random.normal(k2, (nt2, ntraces2), dtype=jnp.float32)
    mod2 = ConvModPallas(wav, nt2, trace_tile=128)
    out2 = jax.block_until_ready(mod2(x2))
    ref2 = ref_forward(x2, wav, nt2)
    assert out2.shape == (nt2, ntraces2)
    assert jnp.allclose(out2, ref2, atol=1e-5, rtol=1e-4), "ragged-tile mismatch"

    print("KERNEL_OK")
</pallas_src>

<mosaic_0001>
module attributes {stable_mosaic.version = 11 : i64} {
  func.func @kernel(%arg0: i32, %arg1: memref<16x8xf32, #tpu.memory_space<vmem>>, %arg2: memref<16x8xf32, #tpu.memory_space<vmem>>, %arg3: memref<24x8xf32, #tpu.memory_space<vmem>>) attributes {dimension_semantics = [#tpu.dimension_semantics<parallel>], iteration_bounds = array<i64: 1>, scalar_prefetch = 0 : i64, scratch_operands = 1 : i64, tpu.core_type = #tpu.core_type<tc>, window_params = [{transform_indices = @transform_0, window_bounds = array<i64: 16, 8>}, {transform_indices = @transform_1, window_bounds = array<i64: 16, 8>}]} {
    %c0 = arith.constant 0 : index
    %c0_0 = arith.constant 0 : index
    %0 = vector.load %arg1[%c0, %c0_0] : memref<16x8xf32, #tpu.memory_space<vmem>>, vector<16x8xf32>
    %c15_i32 = arith.constant 15 : i32
    %1 = tpu.dynamic_rotate %0 by %c15_i32 dim 0 : vector<16x8xf32>, i32 -> vector<16x8xf32>
    %2 = arith.subf %1, %0 : vector<16x8xf32>
    %cst = arith.constant 5.000000e-01 : f32
    %3 = vector.broadcast %cst : f32 to vector<16x8xf32>
    %4 = arith.mulf %3, %2 : vector<16x8xf32>
    %5 = math.tanh %4 : vector<16x8xf32>
    %c0_1 = arith.constant 0 : index
    %c0_2 = arith.constant 0 : index
    %6 = vector.load %arg3[%c0_1, %c0_2] : memref<24x8xf32, #tpu.memory_space<vmem>>, vector<16x8xf32>
    tpu.vector_store %arg3[%c0_1, %c0_2], %5 {strides = array<i32>} : memref<24x8xf32, #tpu.memory_space<vmem>>, vector<16x8xf32>,
    %cst_3 = arith.constant 0.000000e+00 : f32
    %7 = vector.broadcast %cst_3 : f32 to vector<9x8xf32>
    %c15 = arith.constant 15 : index
    %c0_4 = arith.constant 0 : index
    %8 = vector.load %arg3[%c15, %c0_4] : memref<24x8xf32, #tpu.memory_space<vmem>>, vector<9x8xf32>
    tpu.vector_store %arg3[%c15, %c0_4], %7 {strides = array<i32>} : memref<24x8xf32, #tpu.memory_space<vmem>>, vector<9x8xf32>,
    %c0_5 = arith.constant 0 : index
    %c0_6 = arith.constant 0 : index
    %9 = vector.load %arg3[%c0_5, %c0_6] : memref<24x8xf32, #tpu.memory_space<vmem>>, vector<24x8xf32>
    %c3_i32 = arith.constant 3 : i32
    %10 = tpu.dynamic_rotate %9 by %c3_i32 dim 0 : vector<24x8xf32>, i32 -> vector<24x8xf32>
    %cst_7 = arith.constant -0.368897259 : f32
    %11 = vector.broadcast %cst_7 : f32 to vector<24x8xf32>
    %12 = arith.mulf %11, %10 : vector<24x8xf32>
    %c2_i32 = arith.constant 2 : i32
    %13 = tpu.dynamic_rotate %9 by %c2_i32 dim 0 : vector<24x8xf32>, i32 -> vector<24x8xf32>
    %cst_8 = arith.constant -0.36787945 : f32
    %14 = vector.broadcast %cst_8 : f32 to vector<24x8xf32>
    %15 = arith.mulf %14, %13 : vector<24x8xf32>
    %16 = arith.addf %12, %15 : vector<24x8xf32>
    %c1_i32 = arith.constant 1 : i32
    %17 = tpu.dynamic_rotate %9 by %c1_i32 dim 0 : vector<24x8xf32>, i32 -> vector<24x8xf32>
    %cst_9 = arith.constant 0.389400393 : f32
    %18 = vector.broadcast %cst_9 : f32 to vector<24x8xf32>
    %19 = arith.mulf %18, %17 : vector<24x8xf32>
    %20 = arith.addf %16, %19 : vector<24x8xf32>
    %cst_10 = arith.constant 1.000000e+00 : f32
    %21 = vector.broadcast %cst_10 : f32 to vector<24x8xf32>
    %22 = arith.mulf %21, %9 : vector<24x8xf32>
    %23 = arith.addf %20, %22 : vector<24x8xf32>
    %c23_i32 = arith.constant 23 : i32
    %24 = tpu.dynamic_rotate %9 by %c23_i32 dim 0 : vector<24x8xf32>, i32 -> vector<24x8xf32>
    %cst_11 = arith.constant 0.389400393 : f32
    %25 = vector.broadcast %cst_11 : f32 to vector<24x8xf32>
    %26 = arith.mulf %25, %24 : vector<24x8xf32>
    %27 = arith.addf %23, %26 : vector<24x8xf32>
    %c22_i32 = arith.constant 22 : i32
    %28 = tpu.dynamic_rotate %9 by %c22_i32 dim 0 : vector<24x8xf32>, i32 -> vector<24x8xf32>
    %cst_12 = arith.constant -0.36787945 : f32
    %29 = vector.broadcast %cst_12 : f32 to vector<24x8xf32>
    %30 = arith.mulf %29, %28 : vector<24x8xf32>
    %31 = arith.addf %27, %30 : vector<24x8xf32>
    %c21_i32 = arith.constant 21 : i32
    %32 = tpu.dynamic_rotate %9 by %c21_i32 dim 0 : vector<24x8xf32>, i32 -> vector<24x8xf32>
    %cst_13 = arith.constant -0.368897259 : f32
    %33 = vector.broadcast %cst_13 : f32 to vector<24x8xf32>
    %34 = arith.mulf %33, %32 : vector<24x8xf32>
    %35 = arith.addf %31, %34 : vector<24x8xf32>
    %36 = vector.extract_strided_slice %35 {offsets = [0, 0], sizes = [16, 8], strides = [1, 1]} : vector<24x8xf32> to vector<16x8xf32>
    %c0_14 = arith.constant 0 : index
    %c0_15 = arith.constant 0 : index
    %37 = vector.load %arg2[%c0_14, %c0_15] : memref<16x8xf32, #tpu.memory_space<vmem>>, vector<16x8xf32>
    tpu.vector_store %arg2[%c0_14, %c0_15], %36 {strides = array<i32>} : memref<16x8xf32, #tpu.memory_space<vmem>>, vector<16x8xf32>,
    %cst_16 = arith.constant 0.000000e+00 : f32
    %38 = vector.broadcast %cst_16 : f32 to vector<1x8xf32>
    %c15_17 = arith.constant 15 : index
    %c0_18 = arith.constant 0 : index
    %39 = vector.load %arg2[%c15_17, %c0_18] : memref<16x8xf32, #tpu.memory_space<vmem>>, vector<1x8xf32>
    tpu.vector_store %arg2[%c15_17, %c0_18], %38 {strides = array<i32>} : memref<16x8xf32, #tpu.memory_space<vmem>>, vector<1x8xf32>,
    return
  }
  func.func @transform_0(%arg0: i32) -> (i32, i32) {
    %c0_i32 = arith.constant 0 : i32
    %c0_i32_0 = arith.constant 0 : i32
    return %c0_i32, %arg0 : i32, i32
  }
  func.func @transform_1(%arg0: i32) -> (i32, i32) {
    %c0_i32 = arith.constant 0 : i32
    %c0_i32_0 = arith.constant 0 : i32
    return %c0_i32, %arg0 : i32, i32
  }
}

</mosaic_0001>

<llo_original>
// kernel: tpu_custom_call.1
$region0: #{tpu_custom_call.1}
  #allocation0 [shape = 'u32[]', space=smem, size = 0x4, offset = 0x4, fixed_abs, tag = 'smem constant byte address 0x4 - core index']
  #allocation1 [shape = 'u32[144,128]{1,0:T(1,128)}', space=vmem, size = 0x12000, scoped, tag = 'internal scratch']
  #allocation2 [shape = 'f32[24,8]{1,0:T(8,128)}', space=vmem, size = 0x3000, scoped, tag = 'scratch operand']
  %s0 = inlined_call_operand.vmem [shape: f32[16,8], index: 0, kind: input, shape index: {}]
  %s1 = inlined_call_operand.vmem [shape: f32[16,8], index: 1, kind: output, shape index: {}]
  %s2 = sld [smem:[#allocation0]]
  $region14: #{tpu_custom_call.1} parent=0
    _
  %s4 = ssub.s32 1, %s2
  %s5 = scalar_select 0, %s4, %s2
  // Predicated region
  $region2: #{tpu_custom_call.1} parent=0 // pred_check
    _
  $region3: #{tpu_custom_call.1} parent=0 // pred_check_branch
    %7 = sbr.rel (0) target = $region5
  $region4: #{tpu_custom_call.1} parent=0 // pred_region
    _
  $region5: #{tpu_custom_call.1} parent=0 // pred_fallthru
    _
  %v8 = vld [vmem:[%s0] sm:$0xff]
  %v9 = vld [vmem:[%s0 + $0x8] sm:$0xff]
  %v10 = vrot.slane %v8, 1
  %v11 = vrot.slane %v9, 1
  %v12 = vlaneseq
  %v13 = vshrl.u32 %v12, 7
  %vm14 = vcmp.lt.s32.totalorder %v13, 7
  %v15 = vsel %vm14, %v10, %v11
  %v16 = vsel %vm14, %v11, %v10
  %v17 = vsub.f32 %v15, %v8
  %v18 = vsub.f32 %v16, %v9
  %v19 = vmul.f32 %v17, 0.5
  %v20 = vmul.f32 %v18, 0.5
  %v21 = vtanh.pop %v19
  %v22 = vtanh.pop %v20
  %vm23 = vcmask 64512
  %24 = vst.msk [vmem:[#allocation2] sm:$0xff] %vm23, %v21
  %25 = vst.msk [vmem:[#allocation2 + $0x8] sm:$0xff] %vm23, %v22
  %26 = vst.msk [vmem:[#allocation2 + $0xf] sm:$0xff] %vm23, 0.0
  %vm27 = vcmask 57344
  %28 = vst.msk [vmem:[#allocation2 + $0x17] sm:$0x1] %vm27, 0.0
  %v29 = vld [vmem:[#allocation2] sm:$0xff]
  %v30 = vld [vmem:[#allocation2 + $0x8] sm:$0xff]
  %v31 = vld [vmem:[#allocation2 + $0x10] sm:$0xff]
  %v32 = vrot.slane %v29, 5
  %v33 = vrot.slane %v30, 5
  %v34 = vrot.slane %v31, 5
  %vm35 = vcmp.lt.s32.totalorder %v13, 3
  %v36 = vsel %vm35, %v32, %v33
  %v37 = vsel %vm35, %v34, %v32
  %v38 = vmul.f32 %v37, -0.36889726
  %v39 = vmul.f32 %v36, -0.36889726
  %v40 = vrot.slane %v29, 6
  %v41 = vrot.slane %v30, 6
  %v42 = vrot.slane %v31, 6
  %vm43 = vcmp.lt.s32.totalorder %v13, 2
  %v44 = vsel %vm43, %v40, %v41
  %v45 = vsel %vm43, %v42, %v40
  %v46 = vmul.f32 %v45, -0.36787945
  %v47 = vmul.f32 %v44, -0.36787945
  %v48 = vadd.f32 %v38, %v46
  %v49 = vadd.f32 %v39, %v47
  %v50 = vrot.slane %v29, 7
  %v51 = vrot.slane %v30, 7
  %v52 = vrot.slane %v31, 7
  %vm53 = vcmp.lt.s32.totalorder %v13, 1
  %v54 = vsel %vm53, %v50, %v51
  %v55 = vsel %vm53, %v52, %v50
  %v56 = vmul.f32 %v55, 0.3894004
  %v57 = vmul.f32 %v54, 0.3894004
  %v58 = vadd.f32 %v48, %v56
  %v59 = vadd.f32 %v49, %v57
  %v60 = vadd.f32 %v58, %v29
  %v61 = vadd.f32 %v59, %v30
  %v62 = vrot.slane %v29, 1
  %v63 = vrot.slane %v30, 1
  %v64 = vrot.slane %v31, 1
  %v65 = vsel %vm14, %v63, %v64
  %v66 = vsel %vm14, %v62, %v63
  %v67 = vmul.f32 %v66, 0.3894004
  %v68 = vmul.f32 %v65, 0.3894004
  %v69 = vadd.f32 %v60, %v67
  %v70 = vadd.f32 %v61, %v68
  %v71 = vrot.slane %v29, 2
  %v72 = vrot.slane %v30, 2
  %v73 = vrot.slane %v31, 2
  %vm74 = vcmp.lt.s32.totalorder %v13, 6
  %v75 = vsel %vm74, %v72, %v73
  %v76 = vsel %vm74, %v71, %v72
  %v77 = vmul.f32 %v76, -0.36787945
  %v78 = vmul.f32 %v75, -0.36787945
  %v79 = vadd.f32 %v69, %v77
  %v80 = vadd.f32 %v70, %v78
  %v81 = vrot.slane %v29, 3
  %v82 = vrot.slane %v30, 3
  %v83 = vrot.slane %v31, 3
  %vm84 = vcmp.lt.s32.totalorder %v13, 5
  %v85 = vsel %vm84, %v82, %v83
  %v86 = vsel %vm84, %v81, %v82
  %v87 = vmul.f32 %v86, -0.36889726
  %v88 = vmul.f32 %v85, -0.36889726
  %v89 = vadd.f32 %v79, %v87
  %v90 = vadd.f32 %v80, %v88
  %91 = vst.msk [vmem:[%s1] sm:$0xff] %vm23, %v89
  %92 = vst.msk [vmem:[%s1 + $0x8] sm:$0xff] %vm23, %v90
  %93 = vst.msk [vmem:[%s1 + $0xf] sm:$0x1] %vm27, 0.0
  // Predicated region
  $region6: #{tpu_custom_call.1} parent=0 // pred_check
    _
  $region7: #{tpu_custom_call.1} parent=0 // pred_check_branch
    %95 = sbr.rel (0) target = $region9
  $region8: #{tpu_custom_call.1} parent=0 // pred_region
    _
  $region9: #{tpu_custom_call.1} parent=0 // pred_fallthru
    _
  // Predicated region
  $region10: #{tpu_custom_call.1} parent=0 // pred_check
    _
  $region11: #{tpu_custom_call.1} parent=0 // pred_check_branch
    %97 = sbr.rel (0) target = $region13
  $region12: #{tpu_custom_call.1} parent=0 // pred_region
    _
  $region13: #{tpu_custom_call.1} parent=0 // pred_fallthru
    _

</llo_original>
